<compile_context>
chip_gen: v7x
topology: tpu7x:2x2x1
jax: 0.10.0
libtpu: 0.0.40
codegen_flags: <defaults>
</compile_context>

<pallas_src>
import jax
import jax.numpy as jnp
from jax.experimental import pallas as pl
from jax.experimental.pallas import tpu as pltpu

BN_EPS = 1e-5
_VMEM_TILE_BUDGET = 24 * 1024 * 1024   # tile-sizing budget (safe under v7x 64 MiB VMEM)
_VMEM_LIMIT_BYTES = 40 * 1024 * 1024
_NCORES = 2                            # megacore split for pass 1 (v7x); harmless on 1-TC chips
_FUSE_OUTPUT_TRANSPOSE = True          # pass-2 in-kernel transpose; auto-falls back if lowering fails


def _round_up(a, b):
    return (a + b - 1) // b * b


# ------------- pass 1: conv matmul (MXU bf16, f32 acc) + per-channel sum / sum-of-squares -------------
def _conv_stats_kernel(p_ref, w_ref, conv_ref, stats_ref):
    i = pl.program_id(1)                      # reduction ("arbitrary") axis: M tiles of this core

    @pl.when(i == 0)
    def _():
        stats_ref[...] = jnp.zeros_like(stats_ref)

    conv = jnp.dot(p_ref[...], w_ref[...], preferred_element_type=jnp.float32)   # (TR, Cp) f32
    conv_bf = conv.astype(jnp.bfloat16)
    conv_ref[...] = conv_bf                   # bf16 intermediate -> half the HBM traffic

    # Per-channel partial sums from the bf16-rounded values (what pass 2 will read),
    # kept as (8, Cp) slabs: pure VALU adds, no cross-lane reduce in-kernel.
    c = conv_bf.astype(jnp.float32)
    rows, cp = c.shape
    c3 = c.reshape(rows // 8, 8, cp)
    stats_ref[0] += jnp.sum(c3, axis=0)
    stats_ref[1] += jnp.sum(c3 * c3, axis=0)


# ------------- pass 2 (fused): BN affine + ReLU + in-VMEM transpose to channel-major -------------
def _bn_relu_transpose_kernel(conv_ref, scale_ref, shift_ref, out_ref):
    # conv_ref: (TR, Cp) bf16, scale/shift: (1, Cp) f32, out_ref: (Cp, TR) f32
    y = conv_ref[...].astype(jnp.float32) * scale_ref[...] + shift_ref[...]
    out_ref[...] = jnp.maximum(y, 0.0).T      # lane-dense (multiple-of-128) transposed store


# ------------- pass 2 (fallback): BN affine + ReLU, row-major out (XLA transpose after) -------------
def _bn_relu_kernel(conv_ref, scale_ref, shift_ref, out_ref):
    y = conv_ref[...].astype(jnp.float32) * scale_ref[...] + shift_ref[...]
    out_ref[...] = jnp.maximum(y, 0.0)


def _pass2_fused(conv_flat, scale, shift, *, N, OHW_pad, Cp, TR, n_row_tiles):
    conv_nrc = conv_flat.reshape(N, OHW_pad, Cp)          # free, contiguous view
    return pl.pallas_call(
        _bn_relu_transpose_kernel,
        out_shape=jax.ShapeDtypeStruct((N, Cp, OHW_pad), jnp.float32),
        grid=(N, n_row_tiles),
        in_specs=[pl.BlockSpec((None, TR, Cp), lambda n, r: (n, r, 0)),
                  pl.BlockSpec((1, Cp), lambda n, r: (0, 0)),
                  pl.BlockSpec((1, Cp), lambda n, r: (0, 0))],
        out_specs=pl.BlockSpec((None, Cp, TR), lambda n, r: (n, 0, r)),
        compiler_params=pltpu.CompilerParams(
            dimension_semantics=("parallel", "parallel"),
            vmem_limit_bytes=_VMEM_LIMIT_BYTES),
        cost_estimate=pl.CostEstimate(
            flops=3 * N * OHW_pad * Cp, transcendentals=0,
            bytes_accessed=N * OHW_pad * Cp * (2 + 4) + 2 * Cp * 4),
    )(conv_nrc, scale, shift)


def _pass2_plain(conv_flat, scale, shift, *, M_pad, Cp, TR, total_tiles):
    return pl.pallas_call(
        _bn_relu_kernel,
        out_shape=jax.ShapeDtypeStruct((M_pad, Cp), jnp.float32),
        grid=(total_tiles,),
        in_specs=[pl.BlockSpec((TR, Cp), lambda i: (i, 0)),
                  pl.BlockSpec((1, Cp), lambda i: (0, 0)),
                  pl.BlockSpec((1, Cp), lambda i: (0, 0))],
        out_specs=pl.BlockSpec((TR, Cp), lambda i: (i, 0)),
        compiler_params=pltpu.CompilerParams(
            dimension_semantics=("parallel",),
            vmem_limit_bytes=_VMEM_LIMIT_BYTES),
    )(conv_flat, scale, shift)


def block_forward(x, w, gamma, beta, *, tm=None):
    """x: (N,Cin,H,W) f32, w: (Cout,Cin,4,4) f32, gamma/beta: (Cout,) f32 -> (N,Cout,H/2,W/2) f32."""
    global _FUSE_OUTPUT_TRANSPOSE
    N, Cin, H, W = x.shape
    Cout = w.shape[0]
    OH, OW = H // 2, W // 2
    OHW = OH * OW
    M = N * OHW                                 # true sample count for BN stats
    K = Cin * 16
    Cp = _round_up(Cout, 128)                   # lane-dense channel dim (unmasked vst)

    # ---- row-tile: multiple of 128 (lane-dense transposed stores), sized against a VMEM
    # budget that subtracts the bf16 weight double-buffer + f32 temps (v7x 64 MiB safe) ----
    if tm is None:
        fixed = 4 * K * Cp + 256 * Cp + (1 << 16)           # 2x bf16 weight bufs + stats/scale slack
        budget = max(_VMEM_TILE_BUDGET - fixed, 1 << 20)
        per_row = max(4 * K + 12 * Cp,                      # pass 1: bf16 patches + bf16 conv (x2) + f32 temp
                      24 * Cp)                              # pass 2: bf16 in + f32 out (x2) + f32 temps
        tm = budget // per_row
    tm = min(int(tm), 2048, _round_up(OHW, 128))
    TR = max(128, (tm // 128) * 128)

    n_row_tiles = pl.cdiv(OHW, TR)
    OHW_pad = n_row_tiles * TR
    M_pad = N * OHW_pad
    total_tiles = N * n_row_tiles
    ncores = _NCORES if total_tiles % _NCORES == 0 else 1   # 2-way shard only when it divides evenly
    tiles_per_core = total_tiles // ncores

    # ---- glue: NCHW->NHWC + bf16 once, reflect pad, im2col emitted in (kh,kw,Cin) K-order ----
    x_nhwc = jnp.transpose(x, (0, 2, 3, 1)).astype(jnp.bfloat16)
    x_pad = jnp.pad(x_nhwc, ((0, 0), (1, 1), (1, 1), (0, 0)), mode="reflect")
    taps = [x_pad[:, kh:kh + 2 * OH:2, kw:kw + 2 * OW:2, :]
            for kh in range(4) for kw in range(4)]
    patches = jnp.stack(taps, axis=3).reshape(N, OHW, K)
    if OHW_pad != OHW:
        patches = jnp.pad(patches, ((0, 0), (0, OHW_pad - OHW), (0, 0)))   # zero rows: no effect on sums
    patches = patches.reshape(M_pad, K)

    # Weight reordered to match (kh,kw,Cin) K-order, padded to Cp lanes (tiny tensor).
    w2d = jnp.transpose(w, (2, 3, 1, 0)).reshape(K, Cout)
    w2d = jnp.pad(w2d, ((0, 0), (0, Cp - Cout))).astype(jnp.bfloat16)

    # ---- pass 1: tiled conv matmul + per-core resident stats accumulator ----
    # grid = (core shard ["parallel"], M tiles per shard ["arbitrary"]); each shard owns its
    # own 2x(8,Cp) stats slab so megacore sharding on v7x cannot race.
    conv_flat, stats = pl.pallas_call(
        _conv_stats_kernel,
        out_shape=(jax.ShapeDtypeStruct((M_pad, Cp), jnp.bfloat16),
                   jax.ShapeDtypeStruct((ncores * 2, 8, Cp), jnp.float32)),
        grid=(ncores, tiles_per_core),
        in_specs=[pl.BlockSpec((TR, K), lambda c, i: (c * tiles_per_core + i, 0)),
                  pl.BlockSpec((K, Cp), lambda c, i: (0, 0))],
        out_specs=[pl.BlockSpec((TR, Cp), lambda c, i: (c * tiles_per_core + i, 0)),
                   pl.BlockSpec((2, 8, Cp), lambda c, i: (c, 0, 0))],
        compiler_params=pltpu.CompilerParams(
            dimension_semantics=("parallel", "arbitrary"),
            vmem_limit_bytes=_VMEM_LIMIT_BYTES),
        cost_estimate=pl.CostEstimate(
            flops=2 * M_pad * K * Cp,
            transcendentals=0,
            bytes_accessed=M_pad * K * 2 + K * Cp * 2 + M_pad * Cp * 2),
    )(patches, w2d)

    # ---- tiny host combine: fold per-core partial sums -> BN scale/shift (f32 throughout) ----
    stats = stats.reshape(ncores, 2, 8, Cp)
    sum_c = jnp.sum(stats[:, 0], axis=(0, 1))               # (Cp,)
    sumsq = jnp.sum(stats[:, 1], axis=(0, 1))
    mean = sum_c / M                                        # true count (pad rows are zero)
    var = jnp.maximum(sumsq / M - mean * mean, 0.0)         # biased var (training-mode BN)
    inv_std = jax.lax.rsqrt(var + BN_EPS)
    gamma_p = jnp.pad(gamma.astype(jnp.float32), (0, Cp - Cout))
    beta_p = jnp.pad(beta.astype(jnp.float32), (0, Cp - Cout))
    scale = (gamma_p * inv_std).reshape(1, Cp)
    shift = (beta_p - mean * gamma_p * inv_std).reshape(1, Cp)

    # ---- pass 2: BN affine + ReLU, output written channel-major (NCHW fused, no XLA transpose) ----
    if _FUSE_OUTPUT_TRANSPOSE:
        try:
            out_nct = _pass2_fused(conv_flat, scale, shift, N=N, OHW_pad=OHW_pad,
                                   Cp=Cp, TR=TR, n_row_tiles=n_row_tiles)
            # Zero-copy when Cp == Cout and OHW_pad == OHW; otherwise only a pad-stripping slice.
            return out_nct[:, :Cout, :OHW].reshape(N, Cout, OH, OW)
        except Exception:
            _FUSE_OUTPUT_TRANSPOSE = False    # conservative guard: fall back to the plain path

    out2d = _pass2_plain(conv_flat, scale, shift, M_pad=M_pad, Cp=Cp, TR=TR,
                         total_tiles=total_tiles)
    return (out2d.reshape(N, OHW_pad, Cp)[:, :OHW, :Cout]
            .transpose(0, 2, 1).reshape(N, Cout, OH, OW))


# ------------------------------------ reference & tests ------------------------------------
def _reference(x, w, gamma, beta, *, quantize_conv=False):
    x_pad = jnp.pad(x, ((0, 0), (0, 0), (1, 1), (1, 1)), mode="reflect")
    conv = jax.lax.conv_general_dilated(
        x_pad, w, window_strides=(2, 2), padding="VALID",
        dimension_numbers=("NCHW", "OIHW", "NCHW"))
    if quantize_conv:                                   # mirror the kernel's bf16 intermediate
        conv = conv.astype(jnp.bfloat16).astype(jnp.float32)
    mean = conv.mean(axis=(0, 2, 3), keepdims=True)
    var = conv.var(axis=(0, 2, 3), keepdims=True)
    y = (conv - mean) * jax.lax.rsqrt(var + BN_EPS)
    y = y * gamma.reshape(1, -1, 1, 1) + beta.reshape(1, -1, 1, 1)
    return jnp.maximum(y, 0.0)


def _check(name, x, w, gamma, beta, **kw):
    out = jax.block_until_ready(block_forward(x, w, gamma, beta, **kw))
    N, Cin, H, W = x.shape
    Cout = w.shape[0]
    assert out.shape == (N, Cout, H // 2, W // 2), f"{name}: bad output shape"

    # Mixed-precision reference: bf16-rounded conv inputs AND bf16-rounded conv intermediate
    # (the kernel's exact precision pipeline).  Remaining deltas are MXU summation order,
    # which can flip isolated bf16 roundings by <= 1 ulp (~0.8%), hence the tolerance.
    x_bf = x.astype(jnp.bfloat16).astype(jnp.float32)
    w_bf = w.astype(jnp.bfloat16).astype(jnp.float32)
    ref_q = jax.block_until_ready(_reference(x_bf, w_bf, gamma, beta, quantize_conv=True))
    assert jnp.allclose(out, ref_q, atol=2e-2, rtol=2e-2), f"{name}: mismatch vs bf16 reference"
    assert float(jnp.mean(jnp.abs(out - ref_q))) < 1e-3, f"{name}: mean error too large"

    # Loose sanity check vs the full-f32 reference (covers bf16 quantization noise only).
    ref_f = jax.block_until_ready(_reference(x, w, gamma, beta))
    assert jnp.allclose(out, ref_f, atol=1e-1, rtol=1e-1), f"{name}: mismatch vs f32 reference"


if __name__ == "__main__":
    key = jax.random.PRNGKey(0)
    ks = jax.random.split(key, 12)

    def make(k0, k1, k2, k3, N, Cin, H, W, Cout):
        x = jax.random.normal(k0, (N, Cin, H, W), dtype=jnp.float32)
        w = jax.random.normal(k1, (Cout, Cin, 4, 4), dtype=jnp.float32) * 0.1
        g = 1.0 + 0.1 * jax.random.normal(k2, (Cout,), dtype=jnp.float32)
        b = 0.1 * jax.random.normal(k3, (Cout,), dtype=jnp.float32)
        return x, w, g, b

    # A: default tiling, even tile count -> 2-way pass-1 shard, per-image row padding.
    _check("A", *make(*ks[0:4], 2, 4, 16, 16, 8))
    # B: multi-tile stats accumulation along the "arbitrary" axis on each of the 2 shards.
    _check("B", *make(*ks[4:8], 1, 3, 64, 64, 16), tm=128)
    # C: odd tile count -> single-shard fallback, padded OH*OW, Cp > Cout.
    _check("C", *make(*ks[8:12], 1, 3, 48, 48, 8), tm=128)

    print("KERNEL_OK")
</pallas_src>

<mosaic_0001>
module attributes {stable_mosaic.version = 11 : i64} {
  func.func @_conv_stats_kernel(%arg0: i32, %arg1: i32, %arg2: memref<128x64xbf16, #tpu.memory_space<vmem>>, %arg3: memref<64x128xbf16, #tpu.memory_space<vmem>>, %arg4: memref<128x128xbf16, #tpu.memory_space<vmem>>, %arg5: memref<2x8x128xf32, #tpu.memory_space<vmem>>) attributes {dimension_semantics = [#tpu.dimension_semantics<parallel>, #tpu.dimension_semantics<arbitrary>], iteration_bounds = array<i64: 2, 1>, scalar_prefetch = 0 : i64, scratch_operands = 0 : i64, tpu.core_type = #tpu.core_type<tc>, window_params = [{transform_indices = @transform_0, window_bounds = array<i64: 128, 64>}, {pipeline_mode = #tpu.pipeline_mode<synchronous>, transform_indices = @transform_1, window_bounds = array<i64: 64, 128>}, {transform_indices = @transform_2, window_bounds = array<i64: 128, 128>}, {transform_indices = @transform_3, window_bounds = array<i64: 2, 8, 128>}]} {
    %c0_i32 = arith.constant 0 : i32
    %0 = arith.cmpi eq, %arg1, %c0_i32 : i32
    %1 = arith.extui %0 : i1 to i32
    %c0_i32_0 = arith.constant 0 : i32
    %2 = arith.cmpi ne, %1, %c0_i32_0 : i32
    scf.if %2 {
      %cst_19 = arith.constant 0.000000e+00 : f32
      %25 = vector.broadcast %cst_19 : f32 to vector<2x8x128xf32>
      %c0_20 = arith.constant 0 : index
      %c0_21 = arith.constant 0 : index
      %c0_22 = arith.constant 0 : index
      %26 = vector.load %arg5[%c0_20, %c0_21, %c0_22] : memref<2x8x128xf32, #tpu.memory_space<vmem>>, vector<2x8x128xf32>
      tpu.vector_store %arg5[%c0_20, %c0_21, %c0_22], %25 {strides = array<i32>} : memref<2x8x128xf32, #tpu.memory_space<vmem>>, vector<2x8x128xf32>,
    } else {
    }
    %c0 = arith.constant 0 : index
    %c0_1 = arith.constant 0 : index
    %3 = vector.load %arg2[%c0, %c0_1] : memref<128x64xbf16, #tpu.memory_space<vmem>>, vector<128x64xbf16>
    %c0_2 = arith.constant 0 : index
    %c0_3 = arith.constant 0 : index
    %4 = vector.load %arg3[%c0_2, %c0_3] : memref<64x128xbf16, #tpu.memory_space<vmem>>, vector<64x128xbf16>
    %cst = arith.constant dense<0.000000e+00> : vector<128x128xf32>
    %5 = tpu.matmul %3, %4, %cst {dimension_numbers = #tpu.dot_dimension_numbers<[1], [0], [0], [1], [0, 0, 1, 1], [], []>} : vector<128x64xbf16>, vector<64x128xbf16>, vector<128x128xf32> -> vector<128x128xf32>
    %6 = arith.truncf %5 : vector<128x128xf32> to vector<128x128xbf16>
    %c0_4 = arith.constant 0 : index
    %c0_5 = arith.constant 0 : index
    %7 = vector.load %arg4[%c0_4, %c0_5] : memref<128x128xbf16, #tpu.memory_space<vmem>>, vector<128x128xbf16>
    tpu.vector_store %arg4[%c0_4, %c0_5], %6 {strides = array<i32>} : memref<128x128xbf16, #tpu.memory_space<vmem>>, vector<128x128xbf16>,
    %8 = arith.extf %6 : vector<128x128xbf16> to vector<128x128xf32>
    %9 = vector.shape_cast %8 : vector<128x128xf32> to vector<16x8x128xf32>
    %c0_6 = arith.constant 0 : index
    %c0_7 = arith.constant 0 : index
    %c0_8 = arith.constant 0 : index
    %10 = vector.load %arg5[%c0_6, %c0_7, %c0_8] : memref<2x8x128xf32, #tpu.memory_space<vmem>>, vector<1x8x128xf32>
    %11 = vector.shape_cast %10 : vector<1x8x128xf32> to vector<8x128xf32>
    %cst_9 = arith.constant dense<0.000000e+00> : vector<8x128xf32>
    %12 = vector.multi_reduction <add>, %9, %cst_9 [0] : vector<16x8x128xf32> to vector<8x128xf32>
    %13 = arith.addf %11, %12 : vector<8x128xf32>
    %c0_10 = arith.constant 0 : index
    %c0_11 = arith.constant 0 : index
    %c0_12 = arith.constant 0 : index
    %14 = vector.load %arg5[%c0_10, %c0_11, %c0_12] : memref<2x8x128xf32, #tpu.memory_space<vmem>>, vector<1x8x128xf32>
    %15 = vector.shape_cast %14 : vector<1x8x128xf32> to vector<8x128xf32>
    %16 = vector.shape_cast %13 : vector<8x128xf32> to vector<1x8x128xf32>
    tpu.vector_store %arg5[%c0_10, %c0_11, %c0_12], %16 {strides = array<i32>} : memref<2x8x128xf32, #tpu.memory_space<vmem>>, vector<1x8x128xf32>,
    %c1 = arith.constant 1 : index
    %c0_13 = arith.constant 0 : index
    %c0_14 = arith.constant 0 : index
    %17 = vector.load %arg5[%c1, %c0_13, %c0_14] : memref<2x8x128xf32, #tpu.memory_space<vmem>>, vector<1x8x128xf32>
    %18 = vector.shape_cast %17 : vector<1x8x128xf32> to vector<8x128xf32>
    %19 = arith.mulf %9, %9 : vector<16x8x128xf32>
    %cst_15 = arith.constant dense<0.000000e+00> : vector<8x128xf32>
    %20 = vector.multi_reduction <add>, %19, %cst_15 [0] : vector<16x8x128xf32> to vector<8x128xf32>
    %21 = arith.addf %18, %20 : vector<8x128xf32>
    %c1_16 = arith.constant 1 : index
    %c0_17 = arith.constant 0 : index
    %c0_18 = arith.constant 0 : index
    %22 = vector.load %arg5[%c1_16, %c0_17, %c0_18] : memref<2x8x128xf32, #tpu.memory_space<vmem>>, vector<1x8x128xf32>
    %23 = vector.shape_cast %22 : vector<1x8x128xf32> to vector<8x128xf32>
    %24 = vector.shape_cast %21 : vector<8x128xf32> to vector<1x8x128xf32>
    tpu.vector_store %arg5[%c1_16, %c0_17, %c0_18], %24 {strides = array<i32>} : memref<2x8x128xf32, #tpu.memory_space<vmem>>, vector<1x8x128xf32>,
    return
  }
  func.func @transform_0(%arg0: i32, %arg1: i32) -> (i32, i32) {
    %c1_i32 = arith.constant 1 : i32
    %0 = arith.muli %arg0, %c1_i32 : i32
    %1 = arith.addi %0, %arg1 : i32
    %c0_i32 = arith.constant 0 : i32
    %c0_i32_0 = arith.constant 0 : i32
    return %1, %c0_i32 : i32, i32
  }
  func.func @transform_1(%arg0: i32, %arg1: i32) -> (i32, i32) {
    %c0_i32 = arith.constant 0 : i32
    %c0_i32_0 = arith.constant 0 : i32
    %c0_i32_1 = arith.constant 0 : i32
    return %c0_i32, %c0_i32_0 : i32, i32
  }
  func.func @transform_2(%arg0: i32, %arg1: i32) -> (i32, i32) {
    %c1_i32 = arith.constant 1 : i32
    %0 = arith.muli %arg0, %c1_i32 : i32
    %1 = arith.addi %0, %arg1 : i32
    %c0_i32 = arith.constant 0 : i32
    %c0_i32_0 = arith.constant 0 : i32
    return %1, %c0_i32 : i32, i32
  }
  func.func @transform_3(%arg0: i32, %arg1: i32) -> (i32, i32, i32) {
    %c0_i32 = arith.constant 0 : i32
    %c0_i32_0 = arith.constant 0 : i32
    %c0_i32_1 = arith.constant 0 : i32
    return %arg0, %c0_i32, %c0_i32_0 : i32, i32, i32
  }
}

</mosaic_0001>

<llo_original>
// kernel: tpu_custom_call.1
$region0: #{tpu_custom_call.1}
  #allocation0 [shape = 'u32[]', space=smem, size = 0x4, offset = 0x4, fixed_abs, tag = 'smem constant byte address 0x4 - core index']
  #allocation1 [shape = 'u32[144,128]{1,0:T(1,128)}', space=vmem, size = 0x12000, scoped, tag = 'internal scratch']
  %s0 = inlined_call_operand.vmem [shape: bf16[256,64], index: 0, kind: input, shape index: {}]
  %s1 = inlined_call_operand.vmem [shape: bf16[64,128], index: 1, kind: input, shape index: {}]
  %s2 = inlined_call_operand.hbm [shape: bf16[256,128], index: 2, kind: output, shape index: {0}]
  %s3 = inlined_call_operand.hbm [shape: f32[4,8,128], index: 3, kind: output, shape index: {1}]
  %4 = xla_tuple %s2, %s3
  %s5 = sld [smem:[#allocation0]]
  $region53: #{tpu_custom_call.1} parent=0
    _
  %s7 = ssub.s32 1, %s5
  %s8 = scalar_select 0, %s7, %s5
  $region1: #{tpu_custom_call.1} parent=0
    #allocation2 [shape = 'u8[65536]{0}', space=vmem, size = 0x10000, scoped, tag = 'output window, operand 0']
    #allocation3 [shape = 's32[2]{0}', space=sflag, size = 0x8, scoped, tag = 'scoped memory for tpu_custom_call.1']
    #allocation4 [shape = 'u8[16384]{0}', space=vmem, size = 0x4000, scoped, tag = 'output window, operand 1']
    #allocation5 [shape = 's32[2]{0}', space=sflag, size = 0x8, scoped, tag = 'scoped memory for tpu_custom_call.1']
    %9 = vsyncpa [#allocation3], 0
    %s10 = scalar_lea.sflag [#allocation3], 1
    %11 = vsyncpa %s10, 0
    %12 = vsyncpa [#allocation5], 0
    %s13 = scalar_lea.sflag [#allocation5], 1
    %14 = vsyncpa %s13, 0
    loop: start=0, step=1, limit=4
    $region2: #{tpu_custom_call.1} parent=1 // loop_pre_header
      _
    $region3: #{tpu_custom_call.1} parent=1 // loop_header
      %s16 = sphi 0, %s20
      %p17 = scmp.ge.s32.totalorder %s16, 4
      %s23 = sphi 0, %s35
      %s24 = sphi 0, %s31
      %s25 = sphi 0, %s23
      %s26 = sphi 0, %s24
      %s27 = sphi 0, %s25
      %s28 = sphi 0, %s26
      %s40 = sphi 0, %s42
      %s43 = sphi 0, %s40
      %s44 = sphi 0, %s43
      %s60 = sphi 0, %s44
      %s64 = sphi 0, %s64
      %s66 = sphi 0, %s64
      %s67 = sphi 0, %s66
      %s81 = sphi 0, %s67
      %s89 = sphi 0, %s91
      %s92 = sphi 0, %s89
      %s93 = sphi 0, %s92
      %s109 = sphi 0, %s93
      %s115 = sphi 0, %s117
      %s118 = sphi 0, %s115
      %s119 = sphi 0, %s118
      %s135 = sphi 0, %s119
    $region4: #{tpu_custom_call.1} parent=1 // loop_header_branch
      %19 = sbr.rel (%p17) target = $region8
    $region5: #{tpu_custom_call.1} parent=1 // loop_body
      %s21 = ssub.s32 %s16, 1
      %s22 = ssub.s32 %s16, 2
      %s29 = sadd.s32 1, %s24
      %p30 = scmp.ge.s32.totalorder %s29, 1
      %s31 = scalar_select %p30, 0, %s29
      %s32 = sadd.s32 1, %s23
      %s33 = scalar_select %p30, %s32, %s23
      %p34 = scmp.ge.s32.totalorder %s33, 2
      %s35 = scalar_select %p34, 0, %s33
      %s36 = sadd.s32 %s23, %s24
      %s37 = sadd.s32 %s35, %s31
      %s38 = ssub.s32 %s36, %s37
      %p39 = scmp.eq.s32.totalorder %s38, 0
      %s41 = sadd.s32 %s40, 1
      %s42 = scalar_select %p39, %s40, %s41
      %p45 = pneg %p39
      %p46 = scmp.eq.s32.totalorder %s16, 1
      %p47 = por %p45, %p46
      %p48 = scmp.ne.s32.totalorder %s40, %s43
      %p49 = scmp.eq.s32.totalorder %s16, 0
      %p50 = por %p48, %p49
      %p51 = scmp.ne.s32.totalorder %s40, %s43
      %p52 = scmp.eq.s32.totalorder %s21, 1
      %p53 = por %p51, %p52
      %p54 = scmp.ne.s32.totalorder %s43, %s44
      %p55 = scmp.eq.s32.totalorder %s21, 0
      %p56 = por %p54, %p55
      %p57 = scmp.ne.s32.totalorder %s43, %s44
      %p58 = scmp.eq.s32.totalorder %s22, 1
      %p59 = por %p57, %p58
      %p61 = scmp.ne.s32.totalorder %s44, %s60
      %p62 = scmp.eq.s32.totalorder %s22, 0
      %p63 = por %p61, %p62
      %s65 = sadd.s32 %s64, 1
      %p68 = scmp.eq.s32.totalorder %s16, 1
      %p69 = scmp.ne.s32.totalorder %s64, %s66
      %p70 = scmp.eq.s32.totalorder %s16, 0
      %p71 = por %p69, %p70
      %p72 = scmp.ne.s32.totalorder %s64, %s66
      %p73 = scmp.eq.s32.totalorder %s21, 1
      %p74 = por %p72, %p73
      %p75 = scmp.ne.s32.totalorder %s66, %s67
      %p76 = scmp.eq.s32.totalorder %s21, 0
      %p77 = por %p75, %p76
      %p78 = scmp.ne.s32.totalorder %s66, %s67
      %p79 = scmp.eq.s32.totalorder %s22, 1
      %p80 = por %p78, %p79
      %p82 = scmp.ne.s32.totalorder %s67, %s81
      %p83 = scmp.eq.s32.totalorder %s22, 0
      %p84 = por %p82, %p83
      %s85 = sadd.s32 %s23, %s24
      %s86 = sadd.s32 %s35, %s31
      %s87 = ssub.s32 %s85, %s86
      %p88 = scmp.eq.s32.totalorder %s87, 0
      %s90 = sadd.s32 %s89, 1
      %s91 = scalar_select %p88, %s89, %s90
      %p94 = pneg %p88
      %p95 = scmp.eq.s32.totalorder %s16, 1
      %p96 = por %p94, %p95
      %p97 = scmp.ne.s32.totalorder %s89, %s92
      %p98 = scmp.eq.s32.totalorder %s16, 0
      %p99 = por %p97, %p98
      %p100 = scmp.ne.s32.totalorder %s89, %s92
      %p101 = scmp.eq.s32.totalorder %s21, 1
      %p102 = por %p100, %p101
      %p103 = scmp.ne.s32.totalorder %s92, %s93
      %p104 = scmp.eq.s32.totalorder %s21, 0
      %p105 = por %p103, %p104
      %p106 = scmp.ne.s32.totalorder %s92, %s93
      %p107 = scmp.eq.s32.totalorder %s22, 1
      %p108 = por %p106, %p107
      %p110 = scmp.ne.s32.totalorder %s93, %s109
      %p111 = scmp.eq.s32.totalorder %s22, 0
      %p112 = por %p110, %p111
      %s113 = ssub.s32 %s23, %s35
      %p114 = scmp.eq.s32.totalorder %s113, 0
      %s116 = sadd.s32 %s115, 1
      %s117 = scalar_select %p114, %s115, %s116
      %p120 = pneg %p114
      %p121 = scmp.eq.s32.totalorder %s16, 1
      %p122 = por %p120, %p121
      %p123 = scmp.ne.s32.totalorder %s115, %s118
      %p124 = scmp.eq.s32.totalorder %s16, 0
      %p125 = por %p123, %p124
      %p126 = scmp.ne.s32.totalorder %s115, %s118
      %p127 = scmp.eq.s32.totalorder %s21, 1
      %p128 = por %p126, %p127
      %p129 = scmp.ne.s32.totalorder %s118, %s119
      %p130 = scmp.eq.s32.totalorder %s21, 0
      %p131 = por %p129, %p130
      %p132 = scmp.ne.s32.totalorder %s118, %s119
      %p133 = scmp.eq.s32.totalorder %s22, 1
      %p134 = por %p132, %p133
      %p136 = scmp.ne.s32.totalorder %s119, %s135
      %p137 = scmp.eq.s32.totalorder %s22, 0
      %p138 = por %p136, %p137
      %p139 = scmp.le.s32.totalorder 1, %s16
      %p140 = scmp.lt.s32.totalorder %s16, 3
      %p141 = pnand %p139, %p140
      %p142 = pneg %p141
      // Predicated region
      $region9: #{tpu_custom_call.1} parent=5 // pred_check
        _
      $region10: #{tpu_custom_call.1} parent=5 // pred_check_branch
        %144 = sbr.rel (%p141) target = $region12
      $region11: #{tpu_custom_call.1} parent=5 // pred_region
        %s145 = ssub.s32 %s16, 1
        // Predicated region
        $region13: #{tpu_custom_call.1} parent=11 // pred_check
          %p146 = pneg %p77
        $region14: #{tpu_custom_call.1} parent=11 // pred_check_branch
          %148 = sbr.rel (%p146) target = $region16
        $region15: #{tpu_custom_call.1} parent=11 // pred_region
          _
        $region16: #{tpu_custom_call.1} parent=11 // pred_fallthru
          _
      $region12: #{tpu_custom_call.1} parent=5 // pred_fallthru
        _
      %p149 = scmp.lt.s32.totalorder %s16, 2
      // Predicated region
      $region17: #{tpu_custom_call.1} parent=5 // pred_check
        %p150 = pneg %p149
      $region18: #{tpu_custom_call.1} parent=5 // pred_check_branch
        %152 = sbr.rel (%p150) target = $region20
      $region19: #{tpu_custom_call.1} parent=5 // pred_region
        // Predicated region
        $region21: #{tpu_custom_call.1} parent=19 // pred_check
          %p153 = pneg %p50
        $region22: #{tpu_custom_call.1} parent=19 // pred_check_branch
          %155 = sbr.rel (%p153) target = $region24
        $region23: #{tpu_custom_call.1} parent=19 // pred_region
          %s156 = sadd.s32 %s23, %s24
          %s157 = smul.u32 16, %s156
          %p158 = scmp.lt.s32.totalorder %s157, 31
          %s159 = scalar_select %p158, %s157, 31
          %s160 = smul.addr %s159, 4
          %s161 = scalar_lea.vmem %s0, %s160
          %s162 = sadd.s32 %s23, %s24
          %s163 = smul.u32 16, %s162
        $region24: #{tpu_custom_call.1} parent=19 // pred_fallthru
          _
      $region20: #{tpu_custom_call.1} parent=5 // pred_fallthru
        _
      %p164 = scmp.le.s32.totalorder 1, %s16
      %p165 = scmp.lt.s32.totalorder %s16, 3
      %p166 = pnand %p164, %p165
      %p167 = pneg %p166
      // Predicated region
      $region25: #{tpu_custom_call.1} parent=5 // pred_check
        _
      $region26: #{tpu_custom_call.1} parent=5 // pred_check_branch
        %169 = sbr.rel (%p166) target = $region28
      $region27: #{tpu_custom_call.1} parent=5 // pred_region
        %s170 = ssub.s32 %s16, 1
        %s171 = sadd.s32 %s25, %s26
        %s172 = smul.u32 16, %s171
        %p173 = scmp.lt.s32.totalorder %s172, 31
        %s174 = scalar_select %p173, %s172, 31
        %s175 = smul.addr %s174, 4
        %s176 = scalar_lea.vmem %s0, %s175
        %p177 = pneg %p56
        %p178 = pneg %p53
        %p179 = pneg %p77
        %p180 = pneg %p74
        %p181 = pneg %p105
        %p182 = pneg %p102
        %s183 = sand.u32 %s92, 1
        %s184 = scalar_lea.sflag [#allocation3], %s183
        %s185 = sand.u32 %s92, 1
        %s186 = smul.addr %s185, 64
        %s187 = scalar_lea.vmem [#allocation2], %s186
        %p188 = pneg %p131
        %p189 = pneg %p128
        %s190 = sand.u32 %s118, 1
        %s191 = scalar_lea.sflag [#allocation5], %s190
        %s192 = sand.u32 %s118, 1
        %s193 = smul.addr %s192, 16
        %s194 = scalar_lea.vmem [#allocation4], %s193
        %s195 = sadd.s32 %s25, %s26
        %s196 = smul.u32 16, %s195
        %p197 = scmp.lt.s32.totalorder %s196, 31
        %s198 = scalar_select %p197, %s196, 31
        %s199 = smul.addr %s198, 4
        %s200 = scalar_lea.vmem %s0, %s199
        %s201 = sadd.s32 %s25, %s26
        %s202 = smul.u32 16, %s201
        %s203 = sadd.s32 %s25, %s26
        %s204 = smul.u32 16, %s203
        %s205 = smul.u32 2, %s25
        %p207 = scmp.eq.s32.totalorder %s26, 0
        // Predicated region
        $region29: #{tpu_custom_call.1} parent=27 // pred_check
          %p208 = pneg %p207
        $region30: #{tpu_custom_call.1} parent=27 // pred_check_branch
          %210 = sbr.rel (%p208) target = $region32
        $region31: #{tpu_custom_call.1} parent=27 // pred_region
          %211 = vst [vmem:[%s194] sm:$0xff] 0.0
          %212 = vst [vmem:[%s194 + $0x8] sm:$0xff] 0.0
        $region32: #{tpu_custom_call.1} parent=27 // pred_fallthru
          _
        %v213 = vld [vmem:[%s200] sm:$0xf]
        %v214 = vld [vmem:[%s200 + $0x4] sm:$0xf]
        %v215 = vld [vmem:[%s200 + $0x8] sm:$0xf]
        %v216 = vld [vmem:[%s200 + $0xc] sm:$0xf]
        %v217 = vld [vmem:[%s200 + $0x10] sm:$0xf]
        %v218 = vld [vmem:[%s200 + $0x14] sm:$0xf]
        %v219 = vld [vmem:[%s200 + $0x18] sm:$0xf]
        %v220 = vld [vmem:[%s200 + $0x1c] sm:$0xf]
        %v221 = vld [vmem:[%s200 + $0x20] sm:$0xf]
        %v222 = vld [vmem:[%s200 + $0x24] sm:$0xf]
        %v223 = vld [vmem:[%s200 + $0x28] sm:$0xf]
        %v224 = vld [vmem:[%s200 + $0x2c] sm:$0xf]
        %v225 = vld [vmem:[%s200 + $0x30] sm:$0xf]
        %v226 = vld [vmem:[%s200 + $0x34] sm:$0xf]
        %v227 = vld [vmem:[%s200 + $0x38] sm:$0xf]
        %v228 = vld [vmem:[%s200 + $0x3c] sm:$0xf]
        %v229 = vld [vmem:[%s1] sm:$0xf]
        %v230 = vld [vmem:[%s1 + $0x4] sm:$0xf]
        %v231 = vld [vmem:[%s1 + $0x8] sm:$0xf]
        %v232 = vld [vmem:[%s1 + $0xc] sm:$0xf]
        %v233 = vld [vmem:[%s1 + $0x10] sm:$0xf]
        %v234 = vld [vmem:[%s1 + $0x14] sm:$0xf]
        %v235 = vld [vmem:[%s1 + $0x18] sm:$0xf]
        %v236 = vld [vmem:[%s1 + $0x1c] sm:$0xf]
        %v253 = vunpack.c.l.b16 %v213
        %v254 = vunpack.c.l.b16 %v214
        %v255 = vunpack.c.l.b16 %v215
        %v256 = vunpack.c.l.b16 %v216
        %v257 = vunpack.c.l.b16 %v217
        %v258 = vunpack.c.l.b16 %v218
        %v259 = vunpack.c.l.b16 %v219
        %v260 = vunpack.c.l.b16 %v220
        %v261 = vunpack.c.l.b16 %v221
        %v262 = vunpack.c.l.b16 %v222
        %v263 = vunpack.c.l.b16 %v223
        %v264 = vunpack.c.l.b16 %v224
        %v265 = vunpack.c.l.b16 %v225
        %v266 = vunpack.c.l.b16 %v226
        %v267 = vunpack.c.l.b16 %v227
        %v268 = vunpack.c.l.b16 %v228
        %v269 = vpack.c.b16 %v254, %v253
        %v270 = vpack.c.b16 %v256, %v255
        %v271 = vpack.c.b16 %v258, %v257
        %v272 = vpack.c.b16 %v260, %v259
        %v273 = vpack.c.b16 %v262, %v261
        %v274 = vpack.c.b16 %v264, %v263
        %v275 = vpack.c.b16 %v266, %v265
        %v276 = vpack.c.b16 %v268, %v267
        %v285 = vunpack.c.l.b16 %v229
        %v286 = vunpack.c.l.b16 %v230
        %v287 = vunpack.c.l.b16 %v231
        %v288 = vunpack.c.l.b16 %v232
        %v289 = vunpack.c.l.b16 %v233
        %v290 = vunpack.c.l.b16 %v234
        %v291 = vunpack.c.l.b16 %v235
        %v292 = vunpack.c.l.b16 %v236
        %v293 = vpack.c.b16 %v286, %v285
        %v294 = vpack.c.b16 %v288, %v287
        %v295 = vpack.c.b16 %v290, %v289
        %v296 = vpack.c.b16 %v292, %v291
        %vm301 = vcmask 523264
        %v303 = vsel %vm301, %v269, 0
        %v306 = vsel %vm301, %v270, 0
        %v309 = vsel %vm301, %v271, 0
        %v312 = vsel %vm301, %v272, 0
        %v315 = vsel %vm301, %v273, 0
        %v318 = vsel %vm301, %v274, 0
        %v321 = vsel %vm301, %v275, 0
        %v324 = vsel %vm301, %v276, 0
        %326 = vmatprep.subr.bf16.mxu0 0
        %327 = vmatpush1.bf16.msra.mxu0 %v293
        %328 = vmatprep.subr.bf16.mxu0 0
        %329 = vmatpush1.bf16.msra.mxu0 %v294
        %330 = vmatprep.subr.bf16.mxu0 0
        %331 = vmatpush1.bf16.msra.mxu0 %v295
        %332 = vmatprep.subr.bf16.mxu0 0
        %333 = vmatpush1.bf16.msra.mxu0 %v296
        %334 = vmatprep.subr.bf16.mxu0 0
        %335 = vmatpush1.bf16.msra.mxu0 0
        %336 = vmatprep.subr.bf16.mxu0 0
        %337 = vmatpush1.bf16.msra.mxu0 0
        %338 = vmatprep.subr.bf16.mxu0 0
        %339 = vmatpush1.bf16.msra.mxu0 0
        %340 = vmatprep.subr.bf16.mxu0 0
        %341 = vmatpush1.bf16.msra.mxu0 0
        %342 = vmatprep.subr.bf16.mxu0 0
        %343 = vmatpush1.bf16.msra.mxu0 0
        %344 = vmatprep.subr.bf16.mxu0 0
        %345 = vmatpush1.bf16.msra.mxu0 0
        %346 = vmatprep.subr.bf16.mxu0 0
        %347 = vmatpush1.bf16.msra.mxu0 0
        %348 = vmatprep.subr.bf16.mxu0 0
        %349 = vmatpush1.bf16.msra.mxu0 0
        %350 = vmatprep.subr.bf16.mxu0 0
        %351 = vmatpush1.bf16.msra.mxu0 0
        %352 = vmatprep.subr.bf16.mxu0 0
        %353 = vmatpush1.bf16.msra.mxu0 0
        %354 = vmatprep.subr.bf16.mxu0 0
        %355 = vmatpush1.bf16.msra.mxu0 0
        %356 = vmatprep.subr.bf16.mxu0 0
        %357 = vmatpush1.bf16.msra.mxu0 0
        %358 = vmatprep.mubr.bf16.mxu0 0
        %359 = vmatmul.mubr.bf16.gmra.mrb[0].mxu0 %v303
        %v360 = vpop.f32.mrb[0].mxu0
        %v361 = vadd.f32 0.0, %v360
        %v362 = vpop.f32.mrb[0].mxu0
        %v363 = vpop.f32.mrb[0].mxu0
        %v364 = vadd.f32 0.0, %v363
        %v365 = vpop.f32.mrb[0].mxu0
        %366 = vmatprep.mubr.bf16.mxu0 0
        %367 = vmatmul.mubr.bf16.gmra.mrb[0].mxu0 %v306
        %v368 = vpop.f32.mrb[0].mxu0
        %v369 = vadd.f32 0.0, %v368
        %v370 = vpop.f32.mrb[0].mxu0
        %v371 = vpop.f32.mrb[0].mxu0
        %v372 = vadd.f32 0.0, %v371
        %v373 = vpop.f32.mrb[0].mxu0
        %374 = vmatprep.mubr.bf16.mxu0 0
        %375 = vmatmul.mubr.bf16.gmra.mrb[0].mxu0 %v309
        %v376 = vpop.f32.mrb[0].mxu0
        %v377 = vadd.f32 0.0, %v376
        %v378 = vpop.f32.mrb[0].mxu0
        %v379 = vpop.f32.mrb[0].mxu0
        %v380 = vadd.f32 0.0, %v379
        %v381 = vpop.f32.mrb[0].mxu0
        %382 = vmatprep.mubr.bf16.mxu0 0
        %383 = vmatmul.mubr.bf16.gmra.mrb[0].mxu0 %v312
        %v384 = vpop.f32.mrb[0].mxu0
        %v385 = vadd.f32 0.0, %v384
        %v386 = vpop.f32.mrb[0].mxu0
        %v387 = vpop.f32.mrb[0].mxu0
        %v388 = vadd.f32 0.0, %v387
        %v389 = vpop.f32.mrb[0].mxu0
        %390 = vmatprep.mubr.bf16.mxu0 0
        %391 = vmatmul.mubr.bf16.gmra.mrb[0].mxu0 %v315
        %v392 = vpop.f32.mrb[0].mxu0
        %v393 = vadd.f32 0.0, %v392
        %v394 = vpop.f32.mrb[0].mxu0
        %v395 = vpop.f32.mrb[0].mxu0
        %v396 = vadd.f32 0.0, %v395
        %v397 = vpop.f32.mrb[0].mxu0
        %398 = vmatprep.mubr.bf16.mxu0 0
        %399 = vmatmul.mubr.bf16.gmra.mrb[0].mxu0 %v318
        %v400 = vpop.f32.mrb[0].mxu0
        %v401 = vadd.f32 0.0, %v400
        %v402 = vpop.f32.mrb[0].mxu0
        %v403 = vpop.f32.mrb[0].mxu0
        %v404 = vadd.f32 0.0, %v403
        %v405 = vpop.f32.mrb[0].mxu0
        %406 = vmatprep.mubr.bf16.mxu0 0
        %407 = vmatmul.mubr.bf16.gmra.mrb[0].mxu0 %v321
        %v408 = vpop.f32.mrb[0].mxu0
        %v409 = vadd.f32 0.0, %v408
        %v410 = vpop.f32.mrb[0].mxu0
        %v411 = vpop.f32.mrb[0].mxu0
        %v412 = vadd.f32 0.0, %v411
        %v413 = vpop.f32.mrb[0].mxu0
        %414 = vmatprep.mubr.bf16.mxu0 0
        %415 = vmatmul.mubr.bf16.gmra.mrb[0].mxu0 %v324
        %v416 = vpop.f32.mrb[0].mxu0
        %v417 = vadd.f32 0.0, %v416
        %v418 = vpop.f32.mrb[0].mxu0
        %v419 = vpop.f32.mrb[0].mxu0
        %v420 = vadd.f32 0.0, %v419
        %v421 = vpop.f32.mrb[0].mxu0
        %422 = vdwg.mxu0
        %v423 = vpack.c.bf16 %v364, %v361
        %v424 = vpack.c.bf16 %v372, %v369
        %v425 = vpack.c.bf16 %v380, %v377
        %v426 = vpack.c.bf16 %v388, %v385
        %v427 = vpack.c.bf16 %v396, %v393
        %v428 = vpack.c.bf16 %v404, %v401
        %v429 = vpack.c.bf16 %v412, %v409
        %v430 = vpack.c.bf16 %v420, %v417
        %v439 = vunpack.c.l.b16 %v423
        %v440 = vunpack.c.h.b16 %v423
        %v441 = vunpack.c.l.b16 %v424
        %v442 = vunpack.c.h.b16 %v424
        %v443 = vunpack.c.l.b16 %v425
        %v444 = vunpack.c.h.b16 %v425
        %v445 = vunpack.c.l.b16 %v426
        %v446 = vunpack.c.h.b16 %v426
        %v447 = vunpack.c.l.b16 %v427
        %v448 = vunpack.c.h.b16 %v427
        %v449 = vunpack.c.l.b16 %v428
        %v450 = vunpack.c.h.b16 %v428
        %v451 = vunpack.c.l.b16 %v429
        %v452 = vunpack.c.h.b16 %v429
        %v453 = vunpack.c.l.b16 %v430
        %v454 = vunpack.c.h.b16 %v430
        %v455 = vpack.c.b16 %v439, %v439
        %v456 = vpack.c.b16 %v440, %v440
        %v457 = vpack.c.b16 %v441, %v441
        %v458 = vpack.c.b16 %v442, %v442
        %v459 = vpack.c.b16 %v443, %v443
        %v460 = vpack.c.b16 %v444, %v444
        %v461 = vpack.c.b16 %v445, %v445
        %v462 = vpack.c.b16 %v446, %v446
        %v463 = vpack.c.b16 %v447, %v447
        %v464 = vpack.c.b16 %v448, %v448
        %v465 = vpack.c.b16 %v449, %v449
        %v466 = vpack.c.b16 %v450, %v450
        %v467 = vpack.c.b16 %v451, %v451
        %v468 = vpack.c.b16 %v452, %v452
        %v469 = vpack.c.b16 %v453, %v453
        %v470 = vpack.c.b16 %v454, %v454
        %487 = vst [vmem:[%s187] sm:$0xf] %v455
        %488 = vst [vmem:[%s187 + $0x4] sm:$0xf] %v456
        %489 = vst [vmem:[%s187 + $0x8] sm:$0xf] %v457
        %490 = vst [vmem:[%s187 + $0xc] sm:$0xf] %v458
        %491 = vst [vmem:[%s187 + $0x10] sm:$0xf] %v459
        %492 = vst [vmem:[%s187 + $0x14] sm:$0xf] %v460
        %493 = vst [vmem:[%s187 + $0x18] sm:$0xf] %v461
        %494 = vst [vmem:[%s187 + $0x1c] sm:$0xf] %v462
        %495 = vst [vmem:[%s187 + $0x20] sm:$0xf] %v463
        %496 = vst [vmem:[%s187 + $0x24] sm:$0xf] %v464
        %497 = vst [vmem:[%s187 + $0x28] sm:$0xf] %v465
        %498 = vst [vmem:[%s187 + $0x2c] sm:$0xf] %v466
        %499 = vst [vmem:[%s187 + $0x30] sm:$0xf] %v467
        %500 = vst [vmem:[%s187 + $0x34] sm:$0xf] %v468
        %501 = vst [vmem:[%s187 + $0x38] sm:$0xf] %v469
        %502 = vst [vmem:[%s187 + $0x3c] sm:$0xf] %v470
        %v503 = vunpack.c.l.bf16 %v423
        %v504 = vunpack.c.h.bf16 %v423
        %v505 = vunpack.c.l.bf16 %v424
        %v506 = vunpack.c.h.bf16 %v424
        %v507 = vunpack.c.l.bf16 %v425
        %v508 = vunpack.c.h.bf16 %v425
        %v509 = vunpack.c.l.bf16 %v426
        %v510 = vunpack.c.h.bf16 %v426
        %v511 = vunpack.c.l.bf16 %v427
        %v512 = vunpack.c.h.bf16 %v427
        %v513 = vunpack.c.l.bf16 %v428
        %v514 = vunpack.c.h.bf16 %v428
        %v515 = vunpack.c.l.bf16 %v429
        %v516 = vunpack.c.h.bf16 %v429
        %v517 = vunpack.c.l.bf16 %v430
        %v518 = vunpack.c.h.bf16 %v430
        %v519 = vld [vmem:[%s194] sm:$0xff]
        %v520 = vadd.f32 %v503, %v504
        %v521 = vadd.f32 %v520, %v505
        %v522 = vadd.f32 %v521, %v506
        %v523 = vadd.f32 %v522, %v507
        %v524 = vadd.f32 %v523, %v508
        %v525 = vadd.f32 %v524, %v509
        %v526 = vadd.f32 %v525, %v510
        %v527 = vadd.f32 %v526, %v511
        %v528 = vadd.f32 %v527, %v512
        %v529 = vadd.f32 %v528, %v513
        %v530 = vadd.f32 %v529, %v514
        %v531 = vadd.f32 %v530, %v515
        %v532 = vadd.f32 %v531, %v516
        %v533 = vadd.f32 %v532, %v517
        %v534 = vadd.f32 %v533, %v518
        %v535 = vadd.f32 %v519, %v534
        %536 = vst [vmem:[%s194] sm:$0xff] %v535
        %s537 = scalar_lea.vmem %s194, 8 [#allocation4]
        %v538 = vld [vmem:[%s537] sm:$0xff]
        %v539 = vmul.f32 %v503, %v503
        %v540 = vmul.f32 %v504, %v504
        %v541 = vmul.f32 %v505, %v505
        %v542 = vmul.f32 %v506, %v506
        %v543 = vmul.f32 %v507, %v507
        %v544 = vmul.f32 %v508, %v508
        %v545 = vmul.f32 %v509, %v509
        %v546 = vmul.f32 %v510, %v510
        %v547 = vmul.f32 %v511, %v511
        %v548 = vmul.f32 %v512, %v512
        %v549 = vmul.f32 %v513, %v513
        %v550 = vmul.f32 %v514, %v514
        %v551 = vmul.f32 %v515, %v515
        %v552 = vmul.f32 %v516, %v516
        %v553 = vmul.f32 %v517, %v517
        %v554 = vmul.f32 %v518, %v518
        %v555 = vadd.f32 %v539, %v540
        %v556 = vadd.f32 %v555, %v541
        %v557 = vadd.f32 %v556, %v542
        %v558 = vadd.f32 %v557, %v543
        %v559 = vadd.f32 %v558, %v544
        %v560 = vadd.f32 %v559, %v545
        %v561 = vadd.f32 %v560, %v546
        %v562 = vadd.f32 %v561, %v547
        %v563 = vadd.f32 %v562, %v548
        %v564 = vadd.f32 %v563, %v549
        %v565 = vadd.f32 %v564, %v550
        %v566 = vadd.f32 %v565, %v551
        %v567 = vadd.f32 %v566, %v552
        %v568 = vadd.f32 %v567, %v553
        %v569 = vadd.f32 %v568, %v554
        %v570 = vadd.f32 %v538, %v569
        %571 = vst [vmem:[%s537] sm:$0xff] %v570
        %s572 = sand.u32 %s92, 1
        %s573 = scalar_lea.sflag [#allocation3], %s572
        %s574 = sand.u32 %s92, 1
        %s575 = smul.addr %s574, 64
        %s576 = scalar_lea.vmem [#allocation2], %s575
        %s577 = sand.u32 %s118, 1
        %s578 = scalar_lea.sflag [#allocation5], %s577
        %s579 = sand.u32 %s118, 1
        %s580 = smul.addr %s579, 16
        %s581 = scalar_lea.vmem [#allocation4], %s580
        // Predicated region
        $region33: #{tpu_custom_call.1} parent=27 // pred_check
          %p582 = pneg %p102
        $region34: #{tpu_custom_call.1} parent=27 // pred_check_branch
          %584 = sbr.rel (%p582) target = $region36
        $region35: #{tpu_custom_call.1} parent=27 // pred_region
          %s585 = sadd.s32 %s25, %s26
          %s586 = smul.u32 16, %s585
          %s588 = ssub.s32 1024, 1024
          %589 = vsyncadd %s573, %s588
          %s590 = smul.addr %s586, 64
          %s591 = scalar_lea.hbm %s2, %s590
          %s592 = sshll.u32 %s576, 4
          %s593 = int_to_ptr.vmem [resolvable:$true] %s592
          %598 = dma.vmem_to_hbm [thread:$0]  %s593, 1024, %s591, %s573, 64, 64, 4
        $region36: #{tpu_custom_call.1} parent=27 // pred_fallthru
          _
        // Predicated region
        $region37: #{tpu_custom_call.1} parent=27 // pred_check
          %p599 = pneg %p128
        $region38: #{tpu_custom_call.1} parent=27 // pred_check_branch
          %601 = sbr.rel (%p599) target = $region40
        $region39: #{tpu_custom_call.1} parent=27 // pred_region
          %s602 = smul.u32 2, %s25
          %s604 = ssub.s32 256, 256
          %605 = vsyncadd %s578, %s604
          %s606 = smul.addr %s602, 128
          %s607 = scalar_lea.hbm %s3, %s606
          %s608 = sshll.u32 %s581, 4
          %s609 = int_to_ptr.vmem [resolvable:$true] %s608
          %614 = dma.vmem_to_hbm [thread:$0]  %s609, 256, %s607, %s578, 128, 128, 8
        $region40: #{tpu_custom_call.1} parent=27 // pred_fallthru
          _
      $region28: #{tpu_custom_call.1} parent=5 // pred_fallthru
        _
      %p615 = scmp.le.s32.totalorder 2, %s16
      // Predicated region
      $region41: #{tpu_custom_call.1} parent=5 // pred_check
        %p616 = pneg %p615
      $region42: #{tpu_custom_call.1} parent=5 // pred_check_branch
        %618 = sbr.rel (%p616) target = $region44
      $region43: #{tpu_custom_call.1} parent=5 // pred_region
        %s619 = ssub.s32 %s16, 2
        // Predicated region
        $region45: #{tpu_custom_call.1} parent=43 // pred_check
          %p620 = pneg %p108
        $region46: #{tpu_custom_call.1} parent=43 // pred_check_branch
          %622 = sbr.rel (%p620) target = $region48
        $region47: #{tpu_custom_call.1} parent=43 // pred_region
          %s623 = sand.u32 %s93, 1
          %s624 = scalar_lea.sflag [#allocation3], %s623
          %s625 = sand.u32 %s93, 1
          %s626 = smul.addr %s625, 64
          %s627 = scalar_lea.vmem [#allocation2], %s626
          %628 = dma.done %s624, 1024
        $region48: #{tpu_custom_call.1} parent=43 // pred_fallthru
          _
        // Predicated region
        $region49: #{tpu_custom_call.1} parent=43 // pred_check
          %p629 = pneg %p134
        $region50: #{tpu_custom_call.1} parent=43 // pred_check_branch
          %631 = sbr.rel (%p629) target = $region52
        $region51: #{tpu_custom_call.1} parent=43 // pred_region
          %s632 = sand.u32 %s119, 1
          %s633 = scalar_lea.sflag [#allocation5], %s632
          %s634 = sand.u32 %s119, 1
          %s635 = smul.addr %s634, 16
          %s636 = scalar_lea.vmem [#allocation4], %s635
          %637 = dma.done %s633, 256
        $region52: #{tpu_custom_call.1} parent=43 // pred_fallthru
          _
      $region44: #{tpu_custom_call.1} parent=5 // pred_fallthru
        _
    $region6: #{tpu_custom_call.1} parent=1 // loop_footer
      %s20 = sadd.s32 1, %s16
    $region7: #{tpu_custom_call.1} parent=1 // loop_footer_branch
      %15 = sbr.rel target = $region3
    $region8: #{tpu_custom_call.1} parent=1 // loop_exit
      _
    %638 = vsyncpa [#allocation3], 1
    %s639 = scalar_lea.sflag [#allocation3], 1
    %640 = vsyncpa %s639, 1
    %641 = vsyncpa [#allocation5], 1
    %s642 = scalar_lea.sflag [#allocation5], 1
    %643 = vsyncpa %s642, 1

</llo_original>
